<compile_context>
chip_gen: v7x
topology: tpu7x:2x2x1
jax: 0.10.0
libtpu: 0.0.40
codegen_flags: <defaults>
</compile_context>

<pallas_src>
import functools
import math

import jax
import jax.numpy as jnp
from jax import lax
from jax.experimental import pallas as pl
from jax.experimental.pallas import tpu as pltpu

# Explicit scoped-VMEM limit: above the 16/32 MiB defaults, below v7x's 64 MiB
# physical per-TC capacity (review: re-derive budget for v7x).
_VMEM_LIMIT_BYTES = 48 * 1024 * 1024


def _pick_tile(t, pref):
    # Tile the sequence only when it divides evenly; otherwise use full T.
    # TODO(synk): pad T for arbitrary lengths not divisible by the tile.
    if t <= pref or t % pref != 0:
        return t
    return pref


# ----------------------------------------------------------------------------
# Kernel 1: fused per-head QKV projection (K/V hoisted out of the flash loop).
# ----------------------------------------------------------------------------
def _qkv_proj_kernel(x_ref, wqkv_ref, q_ref, k_ref, v_ref, *, head_size, scale):
    h = pl.program_id(2)
    x = x_ref[0]                                        # (tq, C), compute dtype
    qkv = jnp.dot(x, wqkv_ref[h],                       # (tq, 3D), f32 accum
                  preferred_element_type=jnp.float32)
    d = head_size
    q_ref[0, 0] = (qkv[:, 0 * d:1 * d] * jnp.float32(scale)).astype(q_ref.dtype)
    k_ref[0, 0] = qkv[:, 1 * d:2 * d].astype(k_ref.dtype)
    v_ref[0, 0] = qkv[:, 2 * d:3 * d].astype(v_ref.dtype)


def _qkv_projection(x, wqkv, *, head_size, scale, q_tile, compute_dtype):
    B, T, C = x.shape
    H = wqkv.shape[0]
    D = head_size
    tq = _pick_tile(T, q_tile)
    grid = (B, T // tq, H)

    cbytes = jnp.dtype(compute_dtype).itemsize
    flops = 2 * B * T * C * 3 * D * H
    bytes_accessed = int(B * T * C * cbytes            # x (once per (b, qt))
                         + H * C * 3 * D * cbytes      # resident fused weights
                         + 3 * B * H * T * D * cbytes)  # q/k/v outputs
    out_sd = jax.ShapeDtypeStruct((B, H, T, D), compute_dtype)
    kernel = functools.partial(_qkv_proj_kernel, head_size=D, scale=scale)

    return pl.pallas_call(
        kernel,
        out_shape=(out_sd, out_sd, out_sd),
        grid_spec=pltpu.PrefetchScalarGridSpec(
            num_scalar_prefetch=0,
            grid=grid,
            in_specs=[
                # x tile: constant across h -> DMA'd once per (b, qt).
                pl.BlockSpec((1, tq, C), lambda b, qt, h: (b, qt, 0)),
                # Fused [H, C, 3D] weight, VMEM-resident (constant index map).
                pl.BlockSpec((H, C, 3 * D), lambda b, qt, h: (0, 0, 0)),
            ],
            out_specs=[
                pl.BlockSpec((1, 1, tq, D), lambda b, qt, h: (b, h, qt, 0)),
                pl.BlockSpec((1, 1, tq, D), lambda b, qt, h: (b, h, qt, 0)),
                pl.BlockSpec((1, 1, tq, D), lambda b, qt, h: (b, h, qt, 0)),
            ],
        ),
        compiler_params=pltpu.CompilerParams(
            dimension_semantics=("parallel", "parallel", "parallel"),
            vmem_limit_bytes=_VMEM_LIMIT_BYTES,
        ),
        cost_estimate=pl.CostEstimate(flops=flops, transcendentals=0,
                                      bytes_accessed=bytes_accessed),
    )(x, wqkv)


# ----------------------------------------------------------------------------
# Kernel 2: flash attention (online softmax) + fused output projection.
# ----------------------------------------------------------------------------
def _flash_proj_kernel(q_ref, k_ref, v_ref, wp_ref, b_ref, o_ref,
                       m_scr, l_scr, acc_scr, proj_scr, *, tq, tk):
    qt = pl.program_id(1)
    h = pl.program_id(2)
    kv = pl.program_id(3)
    nh = pl.num_programs(2)
    nkv = pl.num_programs(3)

    # Zero the projection accumulator once per (batch, q-tile).
    @pl.when(jnp.logical_and(h == 0, kv == 0))
    def _():
        proj_scr[...] = jnp.zeros_like(proj_scr)

    # New head: reset the online-softmax state.
    @pl.when(kv == 0)
    def _():
        m_scr[...] = jnp.full_like(m_scr, -jnp.inf)
        l_scr[...] = jnp.zeros_like(l_scr)
        acc_scr[...] = jnp.zeros_like(acc_scr)

    row0 = qt * tq
    col0 = kv * tk

    # Skip KV tiles lying entirely above the causal diagonal (their DMA is
    # already elided by the clamped index_map).
    @pl.when(col0 <= row0 + (tq - 1))
    def _():
        q = q_ref[0, 0]                                   # (tq, D), pre-scaled
        k = k_ref[0, 0]                                   # (tk, D)
        v = v_ref[0, 0]                                   # (tk, D)

        # s = q @ k^T as a direct D-contraction (no k.T materialize).
        s = lax.dot_general(q, k, (((1,), (1,)), ((), ())),
                            preferred_element_type=jnp.float32)     # (tq, tk)

        # Causal mask only on tiles that straddle the diagonal; interior
        # (fully-unmasked) tiles skip the iota/compare/where VPU work.
        def _mask(sv):
            rows = row0 + lax.broadcasted_iota(jnp.int32, (tq, tk), 0)
            cols = col0 + lax.broadcasted_iota(jnp.int32, (tq, tk), 1)
            return jnp.where(cols <= rows, sv, -jnp.inf)

        s = lax.cond(col0 + (tk - 1) > row0, _mask, lambda sv: sv, s)

        m_prev = m_scr[...]
        m_new = jnp.maximum(m_prev, jnp.max(s, axis=-1, keepdims=True))
        alpha = jnp.exp(m_prev - m_new)
        p = jnp.exp(s - m_new)
        l_scr[...] = alpha * l_scr[...] + jnp.sum(p, axis=-1, keepdims=True)
        acc_scr[...] = alpha * acc_scr[...] + jnp.dot(
            p.astype(v.dtype), v, preferred_element_type=jnp.float32)
        m_scr[...] = m_new

    # Last KV tile: finish this head and fold it into the projection.
    @pl.when(kv == nkv - 1)
    def _():
        inv_l = pl.reciprocal(l_scr[...], approx=True)                # EUP vrcp
        head_out = (acc_scr[...] * inv_l).astype(q_ref.dtype)         # (tq, D)
        proj_scr[...] += jnp.dot(head_out, wp_ref[h],
                                 preferred_element_type=jnp.float32)

    # Last head & last KV tile: add bias, store one lane-dense (tq, C) tile.
    @pl.when(jnp.logical_and(h == nh - 1, kv == nkv - 1))
    def _():
        o_ref[0] = (proj_scr[...] + b_ref[...]).astype(o_ref.dtype)


def _flash_attention_proj(q, k, v, wp, bias, *, out_dtype, q_tile, kv_tile):
    B, H, T, D = q.shape
    C = wp.shape[-1]
    tq = _pick_tile(T, q_tile)
    tk = _pick_tile(T, kv_tile)
    grid = (B, T // tq, H, T // tk)

    def kv_index_map(b, qt, h, kv):
        # Clamp above-diagonal tiles to the last block actually needed: the
        # block index then repeats and the pipeline elides the wasted DMA.
        last_needed = (qt * tq + tq - 1) // tk
        return (b, h, jnp.minimum(kv, last_needed), 0)

    kernel = functools.partial(_flash_proj_kernel, tq=tq, tk=tk)

    cbytes = jnp.dtype(q.dtype).itemsize
    obytes = jnp.dtype(out_dtype).itemsize
    n_q = T // tq
    kv_restream = max(1, (n_q + 1) // 2)          # causal clamp ~ triangular
    flops = B * H * 2 * T * T * D + 2 * B * T * C * C
    transcendentals = B * H * T * T // 2
    bytes_accessed = int(B * H * T * D * cbytes                     # q
                         + 2 * B * H * T * D * cbytes * kv_restream  # k, v
                         + H * D * C * cbytes + C * 4                # wp, bias
                         + B * T * C * obytes)                       # output

    return pl.pallas_call(
        kernel,
        out_shape=jax.ShapeDtypeStruct((B, T, C), out_dtype),
        grid_spec=pltpu.PrefetchScalarGridSpec(
            num_scalar_prefetch=0,
            grid=grid,
            in_specs=[
                pl.BlockSpec((1, 1, tq, D), lambda b, qt, h, kv: (b, h, qt, 0)),
                pl.BlockSpec((1, 1, tk, D), kv_index_map),           # K
                pl.BlockSpec((1, 1, tk, D), kv_index_map),           # V
                # W_proj: VMEM-resident (constant index map), indexed by h.
                pl.BlockSpec((H, D, C), lambda b, qt, h, kv: (0, 0, 0)),
                pl.BlockSpec((1, C), lambda b, qt, h, kv: (0, 0)),   # bias
            ],
            out_specs=pl.BlockSpec((1, tq, C), lambda b, qt, h, kv: (b, qt, 0)),
            scratch_shapes=[
                pltpu.VMEM((tq, 1), jnp.float32),   # running max m
                pltpu.VMEM((tq, 1), jnp.float32),   # running denom l
                pltpu.VMEM((tq, D), jnp.float32),   # running P@V accumulator
                pltpu.VMEM((tq, C), jnp.float32),   # projection accumulator
            ],
        ),
        compiler_params=pltpu.CompilerParams(
            dimension_semantics=("parallel", "parallel",
                                 "arbitrary", "arbitrary"),
            vmem_limit_bytes=_VMEM_LIMIT_BYTES,
        ),
        cost_estimate=pl.CostEstimate(flops=flops,
                                      transcendentals=transcendentals,
                                      bytes_accessed=bytes_accessed),
    )(q, k, v, wp, bias)


# ----------------------------------------------------------------------------
# Module wrapper
# ----------------------------------------------------------------------------
def multi_head_attention(x, params, *, compute_dtype=jnp.bfloat16,
                         q_tile=256, kv_tile=256):
    """Equivalent of MultiHeadAttention.forward (dropout = identity)."""
    B, T, C = x.shape
    wq, wk, wv = params["wq"], params["wk"], params["wv"]          # [H, C, D]
    H, _, D = wq.shape
    assert H * D == C

    scale = 1.0 / math.sqrt(D)

    # Pre-cast x and all weights to the MXU compute dtype in the wrapper
    # (halves HBM->VMEM bytes, removes per-step VPU casts in the kernels).
    x_c = x.astype(compute_dtype)
    wqkv = jnp.concatenate([wq, wk, wv], axis=-1).astype(compute_dtype)  # [H,C,3D]
    # cat @ W_proj == sum_h head_h @ W_proj[h*D:(h+1)*D, :]  -> per-head slab.
    wp = params["w_proj"].reshape(H, D, C).astype(compute_dtype)         # [H,D,C]
    bias = params["b_proj"].astype(jnp.float32)                          # [1, C]

    # Kernel 1: QKV projection (K/V hoisted, computed exactly once).
    q, k, v = _qkv_projection(x_c, wqkv, head_size=D, scale=scale,
                              q_tile=q_tile, compute_dtype=compute_dtype)

    # Kernel 2: flash attention + fused output projection.
    # Note (v7x): with q_tile=256 keep B*(T/tq) >= 2 so both TCs are busy.
    return _flash_attention_proj(q, k, v, wp, bias, out_dtype=x.dtype,
                                 q_tile=q_tile, kv_tile=kv_tile)


def init_params(key, num_heads, n_embed):
    head_size = n_embed // num_heads
    k1, k2, k3, k4, k5 = jax.random.split(key, 5)
    std = 1.0 / math.sqrt(n_embed)
    # Per-head linear weights stored as [H, C, D] ("x @ W" form).
    wq = jax.random.normal(k1, (num_heads, n_embed, head_size), jnp.float32) * std
    wk = jax.random.normal(k2, (num_heads, n_embed, head_size), jnp.float32) * std
    wv = jax.random.normal(k3, (num_heads, n_embed, head_size), jnp.float32) * std
    # Projection: nn.Linear(n_embed, n_embed), stored pre-transposed ([in, out]).
    w_proj = jax.random.normal(k4, (n_embed, n_embed), jnp.float32) * std
    b_proj = jax.random.normal(k5, (1, n_embed), jnp.float32) * std
    return {"wq": wq, "wk": wk, "wv": wv, "w_proj": w_proj, "b_proj": b_proj}


def _reference(x, params):
    """Pure-JAX f32 reference mirroring the PyTorch module (eval mode)."""
    B, T, C = x.shape
    wq, wk, wv = params["wq"], params["wk"], params["wv"]
    H, _, D = wq.shape
    outs = []
    mask = jnp.tril(jnp.ones((T, T), bool))
    for h in range(H):
        q = x @ wq[h]
        k = x @ wk[h]
        v = x @ wv[h]
        att = (q @ jnp.swapaxes(k, -1, -2)) * (D ** -0.5)
        att = jnp.where(mask, att, -jnp.inf)
        att = jax.nn.softmax(att, axis=-1)
        outs.append(att @ v)
    cat = jnp.concatenate(outs, axis=-1)
    return cat @ params["w_proj"] + params["b_proj"][0]


if __name__ == "__main__":
    # Small shapes consistent with the module: B=2, T(block_size)=8,
    # n_embed=32, num_heads=4 -> head_size=8.
    B, T, n_embed, num_heads = 2, 8, 32, 4
    key = jax.random.PRNGKey(0)
    kx, kp = jax.random.split(key)
    x = jax.random.normal(kx, (B, T, n_embed), jnp.float32)
    params = init_params(kp, num_heads, n_embed)

    ref = _reference(x, params)

    # Full-precision MXU inputs: tight check.
    out_f32 = jax.block_until_ready(
        multi_head_attention(x, params, compute_dtype=jnp.float32))
    assert out_f32.shape == (B, T, n_embed)
    assert jnp.allclose(out_f32, ref, atol=5e-3, rtol=5e-3), "f32 mismatch"

    # bf16 MXU inputs with f32 accumulation: looser check.
    out_bf16 = jax.block_until_ready(
        multi_head_attention(x, params, compute_dtype=jnp.bfloat16))
    assert out_bf16.shape == (B, T, n_embed)
    assert jnp.allclose(out_bf16, ref, atol=8e-2, rtol=8e-2), "bf16 mismatch"

    print("KERNEL_OK")
</pallas_src>

<mosaic_0001>
module attributes {stable_mosaic.version = 11 : i64} {
  func.func @_qkv_proj_kernel(%arg0: i32, %arg1: i32, %arg2: i32, %arg3: memref<1x8x32xf32, #tpu.memory_space<vmem>>, %arg4: memref<4x32x24xf32, #tpu.memory_space<vmem>>, %arg5: memref<1x1x8x8xf32, #tpu.memory_space<vmem>>, %arg6: memref<1x1x8x8xf32, #tpu.memory_space<vmem>>, %arg7: memref<1x1x8x8xf32, #tpu.memory_space<vmem>>) attributes {dimension_semantics = [#tpu.dimension_semantics<parallel>, #tpu.dimension_semantics<parallel>, #tpu.dimension_semantics<parallel>], iteration_bounds = array<i64: 2, 1, 4>, scalar_prefetch = 0 : i64, scratch_operands = 0 : i64, tpu.core_type = #tpu.core_type<tc>, window_params = [{transform_indices = @transform_0, window_bounds = array<i64: 1, 8, 32>}, {pipeline_mode = #tpu.pipeline_mode<synchronous>, transform_indices = @transform_1, window_bounds = array<i64: 4, 32, 24>}, {transform_indices = @transform_2, window_bounds = array<i64: 1, 1, 8, 8>}, {transform_indices = @transform_3, window_bounds = array<i64: 1, 1, 8, 8>}, {transform_indices = @transform_4, window_bounds = array<i64: 1, 1, 8, 8>}]} {
    %c0 = arith.constant 0 : index
    %c0_0 = arith.constant 0 : index
    %c0_1 = arith.constant 0 : index
    %0 = vector.load %arg3[%c0, %c0_0, %c0_1] : memref<1x8x32xf32, #tpu.memory_space<vmem>>, vector<1x8x32xf32>
    %1 = vector.shape_cast %0 : vector<1x8x32xf32> to vector<8x32xf32>
    %2 = arith.index_cast %arg2 : i32 to index
    %c0_2 = arith.constant 0 : index
    %c0_3 = arith.constant 0 : index
    %3 = vector.load %arg4[%2, %c0_2, %c0_3] : memref<4x32x24xf32, #tpu.memory_space<vmem>>, vector<1x32x24xf32>
    %4 = vector.shape_cast %3 : vector<1x32x24xf32> to vector<32x24xf32>
    %cst = arith.constant dense<0.000000e+00> : vector<8x24xf32>
    %5 = tpu.matmul %1, %4, %cst {dimension_numbers = #tpu.dot_dimension_numbers<[1], [0], [0], [1], [0, 0, 1, 1], [], []>} : vector<8x32xf32>, vector<32x24xf32>, vector<8x24xf32> -> vector<8x24xf32>
    %6 = vector.extract_strided_slice %5 {offsets = [0, 0], sizes = [8, 8], strides = [1, 1]} : vector<8x24xf32> to vector<8x8xf32>
    %cst_4 = arith.constant 0.353553385 : f32
    %7 = vector.broadcast %cst_4 : f32 to vector<8x8xf32>
    %8 = arith.mulf %6, %7 : vector<8x8xf32>
    %c0_5 = arith.constant 0 : index
    %c0_6 = arith.constant 0 : index
    %c0_7 = arith.constant 0 : index
    %c0_8 = arith.constant 0 : index
    %9 = vector.load %arg5[%c0_5, %c0_6, %c0_7, %c0_8] : memref<1x1x8x8xf32, #tpu.memory_space<vmem>>, vector<1x1x8x8xf32>
    %10 = vector.shape_cast %9 : vector<1x1x8x8xf32> to vector<8x8xf32>
    %11 = vector.shape_cast %8 : vector<8x8xf32> to vector<1x1x8x8xf32>
    tpu.vector_store %arg5[%c0_5, %c0_6, %c0_7, %c0_8], %11 {strides = array<i32>} : memref<1x1x8x8xf32, #tpu.memory_space<vmem>>, vector<1x1x8x8xf32>,
    %12 = vector.extract_strided_slice %5 {offsets = [0, 8], sizes = [8, 8], strides = [1, 1]} : vector<8x24xf32> to vector<8x8xf32>
    %c0_9 = arith.constant 0 : index
    %c0_10 = arith.constant 0 : index
    %c0_11 = arith.constant 0 : index
    %c0_12 = arith.constant 0 : index
    %13 = vector.load %arg6[%c0_9, %c0_10, %c0_11, %c0_12] : memref<1x1x8x8xf32, #tpu.memory_space<vmem>>, vector<1x1x8x8xf32>
    %14 = vector.shape_cast %13 : vector<1x1x8x8xf32> to vector<8x8xf32>
    %15 = vector.shape_cast %12 : vector<8x8xf32> to vector<1x1x8x8xf32>
    tpu.vector_store %arg6[%c0_9, %c0_10, %c0_11, %c0_12], %15 {strides = array<i32>} : memref<1x1x8x8xf32, #tpu.memory_space<vmem>>, vector<1x1x8x8xf32>,
    %16 = vector.extract_strided_slice %5 {offsets = [0, 16], sizes = [8, 8], strides = [1, 1]} : vector<8x24xf32> to vector<8x8xf32>
    %c0_13 = arith.constant 0 : index
    %c0_14 = arith.constant 0 : index
    %c0_15 = arith.constant 0 : index
    %c0_16 = arith.constant 0 : index
    %17 = vector.load %arg7[%c0_13, %c0_14, %c0_15, %c0_16] : memref<1x1x8x8xf32, #tpu.memory_space<vmem>>, vector<1x1x8x8xf32>
    %18 = vector.shape_cast %17 : vector<1x1x8x8xf32> to vector<8x8xf32>
    %19 = vector.shape_cast %16 : vector<8x8xf32> to vector<1x1x8x8xf32>
    tpu.vector_store %arg7[%c0_13, %c0_14, %c0_15, %c0_16], %19 {strides = array<i32>} : memref<1x1x8x8xf32, #tpu.memory_space<vmem>>, vector<1x1x8x8xf32>,
    return
  }
  func.func @transform_0(%arg0: i32, %arg1: i32, %arg2: i32) -> (i32, i32, i32) {
    %c0_i32 = arith.constant 0 : i32
    %c0_i32_0 = arith.constant 0 : i32
    return %arg0, %arg1, %c0_i32 : i32, i32, i32
  }
  func.func @transform_1(%arg0: i32, %arg1: i32, %arg2: i32) -> (i32, i32, i32) {
    %c0_i32 = arith.constant 0 : i32
    %c0_i32_0 = arith.constant 0 : i32
    %c0_i32_1 = arith.constant 0 : i32
    %c0_i32_2 = arith.constant 0 : i32
    return %c0_i32, %c0_i32_0, %c0_i32_1 : i32, i32, i32
  }
  func.func @transform_2(%arg0: i32, %arg1: i32, %arg2: i32) -> (i32, i32, i32, i32) {
    %c0_i32 = arith.constant 0 : i32
    %c0_i32_0 = arith.constant 0 : i32
    return %arg0, %arg2, %arg1, %c0_i32 : i32, i32, i32, i32
  }
  func.func @transform_3(%arg0: i32, %arg1: i32, %arg2: i32) -> (i32, i32, i32, i32) {
    %c0_i32 = arith.constant 0 : i32
    %c0_i32_0 = arith.constant 0 : i32
    return %arg0, %arg2, %arg1, %c0_i32 : i32, i32, i32, i32
  }
  func.func @transform_4(%arg0: i32, %arg1: i32, %arg2: i32) -> (i32, i32, i32, i32) {
    %c0_i32 = arith.constant 0 : i32
    %c0_i32_0 = arith.constant 0 : i32
    return %arg0, %arg2, %arg1, %c0_i32 : i32, i32, i32, i32
  }
}

</mosaic_0001>

<llo_original>
// kernel: tpu_custom_call.1
$region0: #{tpu_custom_call.1}
  #allocation0 [shape = 'u32[]', space=smem, size = 0x4, offset = 0x4, fixed_abs, tag = 'smem constant byte address 0x4 - core index']
  #allocation1 [shape = 'u32[144,128]{1,0:T(1,128)}', space=vmem, size = 0x12000, scoped, tag = 'internal scratch']
  %s0 = inlined_call_operand.vmem [shape: f32[2,8,32], index: 0, kind: input, shape index: {}]
  %s1 = inlined_call_operand.vmem [shape: f32[4,32,24], index: 1, kind: input, shape index: {}]
  %s2 = inlined_call_operand.hbm [shape: f32[2,4,8,8], index: 2, kind: output, shape index: {0}]
  %s3 = inlined_call_operand.hbm [shape: f32[2,4,8,8], index: 3, kind: output, shape index: {1}]
  %s4 = inlined_call_operand.hbm [shape: f32[2,4,8,8], index: 4, kind: output, shape index: {2}]
  %5 = xla_tuple %s2, %s3, %s4
  %s6 = sld [smem:[#allocation0]]
  $region57: #{tpu_custom_call.1} parent=0
    _
  %s8 = ssub.s32 1, %s6
  %s9 = scalar_select 0, %s8, %s6
  $region1: #{tpu_custom_call.1} parent=0
    #allocation2 [shape = 'u8[8192]{0}', space=vmem, size = 0x2000, scoped, tag = 'output window, operand 0']
    #allocation3 [shape = 's32[2]{0}', space=sflag, size = 0x8, scoped, tag = 'scoped memory for tpu_custom_call.1']
    #allocation4 [shape = 'u8[8192]{0}', space=vmem, size = 0x2000, scoped, tag = 'output window, operand 1']
    #allocation5 [shape = 's32[2]{0}', space=sflag, size = 0x8, scoped, tag = 'scoped memory for tpu_custom_call.1']
    #allocation6 [shape = 'u8[8192]{0}', space=vmem, size = 0x2000, scoped, tag = 'output window, operand 2']
    %10 = vsyncpa [#allocation3], 0
    %s11 = scalar_lea.sflag [#allocation3], 1
    %12 = vsyncpa %s11, 0
    %13 = vsyncpa [#allocation5], 0
    %s14 = scalar_lea.sflag [#allocation5], 1
    %15 = vsyncpa %s14, 0
    loop: start=0, step=1, limit=10
    $region2: #{tpu_custom_call.1} parent=1 // loop_pre_header
      _
    $region3: #{tpu_custom_call.1} parent=1 // loop_header
      %s17 = sphi 0, %s21
      %p18 = scmp.ge.s32.totalorder %s17, 10
      %s24 = sphi 0, %s43
      %s25 = sphi 0, %s39
      %s26 = sphi 0, %s35
      %s27 = sphi 0, %s24
      %s28 = sphi 0, %s25
      %s29 = sphi 0, %s26
      %s30 = sphi 0, %s27
      %s31 = sphi 0, %s28
      %s32 = sphi 0, %s29
      %s48 = sphi 0, %s50
      %s51 = sphi 0, %s48
      %s52 = sphi 0, %s51
      %s68 = sphi 0, %s52
      %s72 = sphi 0, %s72
      %s74 = sphi 0, %s72
      %s75 = sphi 0, %s74
      %s89 = sphi 0, %s75
      %s99 = sphi 0, %s101
      %s102 = sphi 0, %s99
      %s103 = sphi 0, %s102
      %s119 = sphi 0, %s103
      %s129 = sphi 0, %s131
      %s132 = sphi 0, %s129
      %s133 = sphi 0, %s132
      %s149 = sphi 0, %s133
      %s159 = sphi 0, %s161
      %s162 = sphi 0, %s159
      %s163 = sphi 0, %s162
      %s179 = sphi 0, %s163
    $region4: #{tpu_custom_call.1} parent=1 // loop_header_branch
      %20 = sbr.rel (%p18) target = $region8
    $region5: #{tpu_custom_call.1} parent=1 // loop_body
      %s22 = ssub.s32 %s17, 1
      %s23 = ssub.s32 %s17, 2
      %s33 = sadd.s32 1, %s26
      %p34 = scmp.ge.s32.totalorder %s33, 4
      %s35 = scalar_select %p34, 0, %s33
      %s36 = sadd.s32 1, %s25
      %s37 = scalar_select %p34, %s36, %s25
      %p38 = scmp.ge.s32.totalorder %s37, 1
      %s39 = scalar_select %p38, 0, %s37
      %s40 = sadd.s32 1, %s24
      %s41 = scalar_select %p38, %s40, %s24
      %p42 = scmp.ge.s32.totalorder %s41, 2
      %s43 = scalar_select %p42, 0, %s41
      %s44 = ssub.s32 %s24, %s43
      %s45 = ssub.s32 %s25, %s39
      %s46 = sor.u32 %s44, %s45
      %p47 = scmp.eq.s32.totalorder %s46, 0
      %s49 = sadd.s32 %s48, 1
      %s50 = scalar_select %p47, %s48, %s49
      %p53 = pneg %p47
      %p54 = scmp.eq.s32.totalorder %s17, 7
      %p55 = por %p53, %p54
      %p56 = scmp.ne.s32.totalorder %s48, %s51
      %p57 = scmp.eq.s32.totalorder %s17, 0
      %p58 = por %p56, %p57
      %p59 = scmp.ne.s32.totalorder %s48, %s51
      %p60 = scmp.eq.s32.totalorder %s22, 7
      %p61 = por %p59, %p60
      %p62 = scmp.ne.s32.totalorder %s51, %s52
      %p63 = scmp.eq.s32.totalorder %s22, 0
      %p64 = por %p62, %p63
      %p65 = scmp.ne.s32.totalorder %s51, %s52
      %p66 = scmp.eq.s32.totalorder %s23, 7
      %p67 = por %p65, %p66
      %p69 = scmp.ne.s32.totalorder %s52, %s68
      %p70 = scmp.eq.s32.totalorder %s23, 0
      %p71 = por %p69, %p70
      %s73 = sadd.s32 %s72, 1
      %p76 = scmp.eq.s32.totalorder %s17, 7
      %p77 = scmp.ne.s32.totalorder %s72, %s74
      %p78 = scmp.eq.s32.totalorder %s17, 0
      %p79 = por %p77, %p78
      %p80 = scmp.ne.s32.totalorder %s72, %s74
      %p81 = scmp.eq.s32.totalorder %s22, 7
      %p82 = por %p80, %p81
      %p83 = scmp.ne.s32.totalorder %s74, %s75
      %p84 = scmp.eq.s32.totalorder %s22, 0
      %p85 = por %p83, %p84
      %p86 = scmp.ne.s32.totalorder %s74, %s75
      %p87 = scmp.eq.s32.totalorder %s23, 7
      %p88 = por %p86, %p87
      %p90 = scmp.ne.s32.totalorder %s75, %s89
      %p91 = scmp.eq.s32.totalorder %s23, 0
      %p92 = por %p90, %p91
      %s93 = ssub.s32 %s24, %s43
      %s94 = ssub.s32 %s26, %s35
      %s95 = sor.u32 %s93, %s94
      %s96 = ssub.s32 %s25, %s39
      %s97 = sor.u32 %s95, %s96
      %p98 = scmp.eq.s32.totalorder %s97, 0
      %s100 = sadd.s32 %s99, 1
      %s101 = scalar_select %p98, %s99, %s100
      %p104 = pneg %p98
      %p105 = scmp.eq.s32.totalorder %s17, 7
      %p106 = por %p104, %p105
      %p107 = scmp.ne.s32.totalorder %s99, %s102
      %p108 = scmp.eq.s32.totalorder %s17, 0
      %p109 = por %p107, %p108
      %p110 = scmp.ne.s32.totalorder %s99, %s102
      %p111 = scmp.eq.s32.totalorder %s22, 7
      %p112 = por %p110, %p111
      %p113 = scmp.ne.s32.totalorder %s102, %s103
      %p114 = scmp.eq.s32.totalorder %s22, 0
      %p115 = por %p113, %p114
      %p116 = scmp.ne.s32.totalorder %s102, %s103
      %p117 = scmp.eq.s32.totalorder %s23, 7
      %p118 = por %p116, %p117
      %p120 = scmp.ne.s32.totalorder %s103, %s119
      %p121 = scmp.eq.s32.totalorder %s23, 0
      %p122 = por %p120, %p121
      %s123 = ssub.s32 %s24, %s43
      %s124 = ssub.s32 %s26, %s35
      %s125 = sor.u32 %s123, %s124
      %s126 = ssub.s32 %s25, %s39
      %s127 = sor.u32 %s125, %s126
      %p128 = scmp.eq.s32.totalorder %s127, 0
      %s130 = sadd.s32 %s129, 1
      %s131 = scalar_select %p128, %s129, %s130
      %p134 = pneg %p128
      %p135 = scmp.eq.s32.totalorder %s17, 7
      %p136 = por %p134, %p135
      %p137 = scmp.ne.s32.totalorder %s129, %s132
      %p138 = scmp.eq.s32.totalorder %s17, 0
      %p139 = por %p137, %p138
      %p140 = scmp.ne.s32.totalorder %s129, %s132
      %p141 = scmp.eq.s32.totalorder %s22, 7
      %p142 = por %p140, %p141
      %p143 = scmp.ne.s32.totalorder %s132, %s133
      %p144 = scmp.eq.s32.totalorder %s22, 0
      %p145 = por %p143, %p144
      %p146 = scmp.ne.s32.totalorder %s132, %s133
      %p147 = scmp.eq.s32.totalorder %s23, 7
      %p148 = por %p146, %p147
      %p150 = scmp.ne.s32.totalorder %s133, %s149
      %p151 = scmp.eq.s32.totalorder %s23, 0
      %p152 = por %p150, %p151
      %s153 = ssub.s32 %s24, %s43
      %s154 = ssub.s32 %s26, %s35
      %s155 = sor.u32 %s153, %s154
      %s156 = ssub.s32 %s25, %s39
      %s157 = sor.u32 %s155, %s156
      %p158 = scmp.eq.s32.totalorder %s157, 0
      %s160 = sadd.s32 %s159, 1
      %s161 = scalar_select %p158, %s159, %s160
      %p164 = pneg %p158
      %p165 = scmp.eq.s32.totalorder %s17, 7
      %p166 = por %p164, %p165
      %p167 = scmp.ne.s32.totalorder %s159, %s162
      %p168 = scmp.eq.s32.totalorder %s17, 0
      %p169 = por %p167, %p168
      %p170 = scmp.ne.s32.totalorder %s159, %s162
      %p171 = scmp.eq.s32.totalorder %s22, 7
      %p172 = por %p170, %p171
      %p173 = scmp.ne.s32.totalorder %s162, %s163
      %p174 = scmp.eq.s32.totalorder %s22, 0
      %p175 = por %p173, %p174
      %p176 = scmp.ne.s32.totalorder %s162, %s163
      %p177 = scmp.eq.s32.totalorder %s23, 7
      %p178 = por %p176, %p177
      %p180 = scmp.ne.s32.totalorder %s163, %s179
      %p181 = scmp.eq.s32.totalorder %s23, 0
      %p182 = por %p180, %p181
      %p183 = scmp.le.s32.totalorder 1, %s17
      %p184 = scmp.lt.s32.totalorder %s17, 9
      %p185 = pnand %p183, %p184
      %p186 = pneg %p185
      // Predicated region
      $region9: #{tpu_custom_call.1} parent=5 // pred_check
        _
      $region10: #{tpu_custom_call.1} parent=5 // pred_check_branch
        %188 = sbr.rel (%p185) target = $region12
      $region11: #{tpu_custom_call.1} parent=5 // pred_region
        %s189 = ssub.s32 %s17, 1
        // Predicated region
        $region13: #{tpu_custom_call.1} parent=11 // pred_check
          %p190 = pneg %p85
        $region14: #{tpu_custom_call.1} parent=11 // pred_check_branch
          %192 = sbr.rel (%p190) target = $region16
        $region15: #{tpu_custom_call.1} parent=11 // pred_region
          _
        $region16: #{tpu_custom_call.1} parent=11 // pred_fallthru
          _
      $region12: #{tpu_custom_call.1} parent=5 // pred_fallthru
        _
      %p193 = scmp.lt.s32.totalorder %s17, 8
      // Predicated region
      $region17: #{tpu_custom_call.1} parent=5 // pred_check
        %p194 = pneg %p193
      $region18: #{tpu_custom_call.1} parent=5 // pred_check_branch
        %196 = sbr.rel (%p194) target = $region20
      $region19: #{tpu_custom_call.1} parent=5 // pred_region
        // Predicated region
        $region21: #{tpu_custom_call.1} parent=19 // pred_check
          %p197 = pneg %p58
        $region22: #{tpu_custom_call.1} parent=19 // pred_check_branch
          %199 = sbr.rel (%p197) target = $region24
        $region23: #{tpu_custom_call.1} parent=19 // pred_region
          %p200 = scmp.lt.s32.totalorder %s24, 1
          %s201 = scalar_select %p200, %s24, 1
          %p202 = scmp.lt.s32.totalorder %s25, 0
          %s203 = scalar_select %p202, %s25, 0
          %s204 = sadd.s32 %s203, %s201
          %s205 = smul.addr %s204, 8
          %s206 = scalar_lea.vmem %s0, %s205
        $region24: #{tpu_custom_call.1} parent=19 // pred_fallthru
          _
      $region20: #{tpu_custom_call.1} parent=5 // pred_fallthru
        _
      %p207 = scmp.le.s32.totalorder 1, %s17
      %p208 = scmp.lt.s32.totalorder %s17, 9
      %p209 = pnand %p207, %p208
      %p210 = pneg %p209
      // Predicated region
      $region25: #{tpu_custom_call.1} parent=5 // pred_check
        _
      $region26: #{tpu_custom_call.1} parent=5 // pred_check_branch
        %212 = sbr.rel (%p209) target = $region28
      $region27: #{tpu_custom_call.1} parent=5 // pred_region
        %s213 = ssub.s32 %s17, 1
        %p214 = scmp.lt.s32.totalorder %s27, 1
        %s215 = scalar_select %p214, %s27, 1
        %p216 = scmp.lt.s32.totalorder %s28, 0
        %s217 = scalar_select %p216, %s28, 0
        %s218 = sadd.s32 %s217, %s215
        %s219 = smul.addr %s218, 8
        %s220 = scalar_lea.vmem %s0, %s219
        %p221 = pneg %p64
        %p222 = pneg %p61
        %p223 = pneg %p85
        %p224 = pneg %p82
        %p225 = pneg %p115
        %p226 = pneg %p112
        %s227 = sand.u32 %s102, 1
        %s228 = scalar_lea.sflag [#allocation3], %s227
        %s229 = sand.u32 %s102, 1
        %s230 = smul.addr %s229, 8
        %s231 = scalar_lea.vmem [#allocation2], %s230
        %p232 = pneg %p145
        %p233 = pneg %p142
        %s234 = sand.u32 %s22, 1
        %s235 = scalar_lea.sflag [#allocation5], %s234
        %s236 = sand.u32 %s132, 1
        %s237 = smul.addr %s236, 8
        %s238 = scalar_lea.vmem [#allocation4], %s237
        %p239 = pneg %p175
        %p240 = pneg %p172
        %s241 = sand.u32 %s22, 1
        %s242 = scalar_lea.sflag [#allocation5], %s241
        %s243 = sand.u32 %s162, 1
        %s244 = smul.addr %s243, 8
        %s245 = scalar_lea.vmem [#allocation6], %s244
        %p246 = scmp.lt.s32.totalorder %s27, 1
        %s247 = scalar_select %p246, %s27, 1
        %p248 = scmp.lt.s32.totalorder %s28, 0
        %s249 = scalar_select %p248, %s28, 0
        %s250 = sadd.s32 %s249, %s247
        %s251 = smul.addr %s250, 8
        %s252 = scalar_lea.vmem %s0, %s251
        %v253 = vld [vmem:[%s252] sm:$0xff]
        %s254 = smul.u32 %s29, 32
        %s255 = scalar_lea.vmem %s1, %s254
        %v256 = vld [vmem:[%s255] sm:$0xff]
        %v257 = vld [vmem:[%s255 + $0x8] sm:$0xff]
        %v258 = vld [vmem:[%s255 + $0x10] sm:$0xff]
        %v259 = vld [vmem:[%s255 + $0x18] sm:$0xff]
        %vm260 = vcmask 261120
        %v262 = vsel %vm260, %v253, 0
        %264 = vmatprep.subr.mxu0 0.0
        %265 = vmatpush1.msra.mxu0 %v256
        %266 = vmatprep.subr.mxu0 0.0
        %267 = vmatpush1.msra.mxu0 %v257
        %268 = vmatprep.subr.mxu0 0.0
        %269 = vmatpush1.msra.mxu0 %v258
        %270 = vmatprep.subr.mxu0 0.0
        %271 = vmatpush1.msra.mxu0 %v259
        %272 = vmatprep.subr.mxu0 0.0
        %273 = vmatpush1.msra.mxu0 0.0
        %274 = vmatprep.subr.mxu0 0.0
        %275 = vmatpush1.msra.mxu0 0.0
        %276 = vmatprep.subr.mxu0 0.0
        %277 = vmatpush1.msra.mxu0 0.0
        %278 = vmatprep.subr.mxu0 0.0
        %279 = vmatpush1.msra.mxu0 0.0
        %280 = vmatprep.subr.mxu0 0.0
        %281 = vmatpush1.msra.mxu0 0.0
        %282 = vmatprep.subr.mxu0 0.0
        %283 = vmatpush1.msra.mxu0 0.0
        %284 = vmatprep.subr.mxu0 0.0
        %285 = vmatpush1.msra.mxu0 0.0
        %286 = vmatprep.subr.mxu0 0.0
        %287 = vmatpush1.msra.mxu0 0.0
        %288 = vmatprep.subr.mxu0 0.0
        %289 = vmatpush1.msra.mxu0 0.0
        %290 = vmatprep.subr.mxu0 0.0
        %291 = vmatpush1.msra.mxu0 0.0
        %292 = vmatprep.subr.mxu0 0.0
        %293 = vmatpush1.msra.mxu0 0.0
        %294 = vmatprep.subr.mxu0 0.0
        %295 = vmatpush1.msra.mxu0 0.0
        %296 = vmatprep.subr.mxu0 0.0
        %297 = vmatpush1.msra.mxu0 0.0
        %298 = vmatprep.subr.mxu0 0.0
        %299 = vmatpush1.msra.mxu0 0.0
        %300 = vmatprep.subr.mxu0 0.0
        %301 = vmatpush1.msra.mxu0 0.0
        %302 = vmatprep.subr.mxu0 0.0
        %303 = vmatpush1.msra.mxu0 0.0
        %304 = vmatprep.subr.mxu0 0.0
        %305 = vmatpush1.msra.mxu0 0.0
        %306 = vmatprep.subr.mxu0 0.0
        %307 = vmatpush1.msra.mxu0 0.0
        %308 = vmatprep.subr.mxu0 0.0
        %309 = vmatpush1.msra.mxu0 0.0
        %310 = vmatprep.subr.mxu0 0.0
        %311 = vmatpush1.msra.mxu0 0.0
        %312 = vmatprep.subr.mxu0 0.0
        %313 = vmatpush1.msra.mxu0 0.0
        %314 = vmatprep.subr.mxu0 0.0
        %315 = vmatpush1.msra.mxu0 0.0
        %316 = vmatprep.subr.mxu0 0.0
        %317 = vmatpush1.msra.mxu0 0.0
        %318 = vmatprep.subr.mxu0 0.0
        %319 = vmatpush1.msra.mxu0 0.0
        %320 = vmatprep.subr.mxu0 0.0
        %321 = vmatpush1.msra.mxu0 0.0
        %322 = vmatprep.subr.mxu0 0.0
        %323 = vmatpush1.msra.mxu0 0.0
        %324 = vmatprep.subr.mxu0 0.0
        %325 = vmatpush1.msra.mxu0 0.0
        %326 = vmatprep.subr.mxu0 0.0
        %327 = vmatpush1.msra.mxu0 0.0
        %328 = vmatprep.mubr.f32.mxu0 0.0
        %329 = vmatmul.mubr.f32.gmra.mrb[0].mxu0 %v262
        %v330 = vpop.f32.mrb[0].mxu0
        %v331 = vadd.f32 0.0, %v330
        %v332 = vpop.f32.mrb[0].mxu0
        %333 = vdwg.mxu0
        %v334 = vmul.f32 %v331, 0.35355338
        %vm335 = vcmask 64512
        %336 = vst.msk [vmem:[%s231] sm:$0xff] %vm335, %v334
        %338 = vrot.lane.b32.xlu0 %v331, 120
        %v339 = vpop.permute.xlu0 %338
        %341 = vst.msk [vmem:[%s238] sm:$0xff] %vm335, %v339
        %342 = vrot.lane.b32.xlu0 %v331, 112
        %v343 = vpop.permute.xlu0 %342
        %345 = vst.msk [vmem:[%s245] sm:$0xff] %vm335, %v343
        %s346 = sand.u32 %s102, 1
        %s347 = scalar_lea.sflag [#allocation3], %s346
        %s348 = sand.u32 %s102, 1
        %s349 = smul.addr %s348, 8
        %s350 = scalar_lea.vmem [#allocation2], %s349
        %s351 = sand.u32 %s22, 1
        %s352 = scalar_lea.sflag [#allocation5], %s351
        %s353 = sand.u32 %s132, 1
        %s354 = smul.addr %s353, 8
        %s355 = scalar_lea.vmem [#allocation4], %s354
        %s356 = sand.u32 %s22, 1
        %s357 = scalar_lea.sflag [#allocation5], %s356
        %s358 = sand.u32 %s162, 1
        %s359 = smul.addr %s358, 8
        %s360 = scalar_lea.vmem [#allocation6], %s359
        // Predicated region
        $region29: #{tpu_custom_call.1} parent=27 // pred_check
          %p361 = pneg %p112
        $region30: #{tpu_custom_call.1} parent=27 // pred_check_branch
          %363 = sbr.rel (%p361) target = $region32
        $region31: #{tpu_custom_call.1} parent=27 // pred_region
          %s365 = ssub.s32 128, 128
          %366 = vsyncadd %s347, %s365
          %s367 = sadd.s32 %s28, %s29
          %s368 = smul.addr %s27, 4
          %s369 = sadd.s32 %s367, %s368
          %s370 = smul.addr %s369, 128
          %s371 = scalar_lea.hbm %s2, %s370
          %s373 = sshll.u32 %s350, 4
          %s374 = int_to_ptr.vmem [resolvable:$true] %s373
          %376 = dma.vmem_to_hbm [thread:$0]  %s374, 128, %s371, %s347
        $region32: #{tpu_custom_call.1} parent=27 // pred_fallthru
          _
        // Predicated region
        $region33: #{tpu_custom_call.1} parent=27 // pred_check
          %p377 = pneg %p142
        $region34: #{tpu_custom_call.1} parent=27 // pred_check_branch
          %379 = sbr.rel (%p377) target = $region36
        $region35: #{tpu_custom_call.1} parent=27 // pred_region
          %s381 = ssub.s32 128, 128
          %382 = vsyncadd %s352, %s381
          %s383 = sadd.s32 %s28, %s29
          %s384 = smul.addr %s27, 4
          %s385 = sadd.s32 %s383, %s384
          %s386 = smul.addr %s385, 128
          %s387 = scalar_lea.hbm %s3, %s386
          %s389 = sshll.u32 %s355, 4
          %s390 = int_to_ptr.vmem [resolvable:$true] %s389
          %392 = dma.vmem_to_hbm [thread:$0]  %s390, 128, %s387, %s352
        $region36: #{tpu_custom_call.1} parent=27 // pred_fallthru
          _
        // Predicated region
        $region37: #{tpu_custom_call.1} parent=27 // pred_check
          %p393 = pneg %p172
        $region38: #{tpu_custom_call.1} parent=27 // pred_check_branch
          %395 = sbr.rel (%p393) target = $region40
        $region39: #{tpu_custom_call.1} parent=27 // pred_region
          %s397 = ssub.s32 128, 128
          %398 = vsyncadd %s357, %s397
          %s399 = sadd.s32 %s28, %s29
          %s400 = smul.addr %s27, 4
          %s401 = sadd.s32 %s399, %s400
          %s402 = smul.addr %s401, 128
          %s403 = scalar_lea.hbm %s4, %s402
          %s405 = sshll.u32 %s360, 4
          %s406 = int_to_ptr.vmem [resolvable:$true] %s405
          %408 = dma.vmem_to_hbm [thread:$0]  %s406, 128, %s403, %s357
        $region40: #{tpu_custom_call.1} parent=27 // pred_fallthru
          _
      $region28: #{tpu_custom_call.1} parent=5 // pred_fallthru
        _
      %p409 = scmp.le.s32.totalorder 2, %s17
      // Predicated region
      $region41: #{tpu_custom_call.1} parent=5 // pred_check
        %p410 = pneg %p409
      $region42: #{tpu_custom_call.1} parent=5 // pred_check_branch
        %412 = sbr.rel (%p410) target = $region44
      $region43: #{tpu_custom_call.1} parent=5 // pred_region
        %s413 = ssub.s32 %s17, 2
        // Predicated region
        $region45: #{tpu_custom_call.1} parent=43 // pred_check
          %p414 = pneg %p118
        $region46: #{tpu_custom_call.1} parent=43 // pred_check_branch
          %416 = sbr.rel (%p414) target = $region48
        $region47: #{tpu_custom_call.1} parent=43 // pred_region
          %s417 = sand.u32 %s103, 1
          %s418 = scalar_lea.sflag [#allocation3], %s417
          %s419 = sand.u32 %s103, 1
          %s420 = smul.addr %s419, 8
          %s421 = scalar_lea.vmem [#allocation2], %s420
          %422 = dma.done %s418, 128
        $region48: #{tpu_custom_call.1} parent=43 // pred_fallthru
          _
        // Predicated region
        $region49: #{tpu_custom_call.1} parent=43 // pred_check
          %p423 = pneg %p148
        $region50: #{tpu_custom_call.1} parent=43 // pred_check_branch
          %425 = sbr.rel (%p423) target = $region52
        $region51: #{tpu_custom_call.1} parent=43 // pred_region
          %s426 = sand.u32 %s23, 1
          %s427 = scalar_lea.sflag [#allocation5], %s426
          %s428 = sand.u32 %s133, 1
          %s429 = smul.addr %s428, 8
          %s430 = scalar_lea.vmem [#allocation4], %s429
          %431 = dma.done %s427, 128
        $region52: #{tpu_custom_call.1} parent=43 // pred_fallthru
          _
        // Predicated region
        $region53: #{tpu_custom_call.1} parent=43 // pred_check
          %p432 = pneg %p178
        $region54: #{tpu_custom_call.1} parent=43 // pred_check_branch
          %434 = sbr.rel (%p432) target = $region56
        $region55: #{tpu_custom_call.1} parent=43 // pred_region
          %s435 = sand.u32 %s23, 1
          %s436 = scalar_lea.sflag [#allocation5], %s435
          %s437 = sand.u32 %s163, 1
          %s438 = smul.addr %s437, 8
          %s439 = scalar_lea.vmem [#allocation6], %s438
          %440 = dma.done %s436, 128
        $region56: #{tpu_custom_call.1} parent=43 // pred_fallthru
          _
      $region44: #{tpu_custom_call.1} parent=5 // pred_fallthru
        _
    $region6: #{tpu_custom_call.1} parent=1 // loop_footer
      %s21 = sadd.s32 1, %s17
    $region7: #{tpu_custom_call.1} parent=1 // loop_footer_branch
      %16 = sbr.rel target = $region3
    $region8: #{tpu_custom_call.1} parent=1 // loop_exit
      _
    %441 = vsyncpa [#allocation3], 1
    %s442 = scalar_lea.sflag [#allocation3], 1
    %443 = vsyncpa %s442, 1
    %444 = vsyncpa [#allocation5], 1
    %s445 = scalar_lea.sflag [#allocation5], 1
    %446 = vsyncpa %s445, 1

</llo_original>
